<compile_context>
chip_gen: v7x
topology: tpu7x:2x2x1
jax: 0.10.0
libtpu: 0.0.40
codegen_flags: <defaults>
</compile_context>

<pallas_src>
import functools

import jax
import jax.numpy as jnp
from jax.experimental import pallas as pl
from jax.experimental.pallas import tpu as pltpu


def _wce_sum_kernel(pred_ref, tgt_ref, out_ref, acc_ref, *, hw, tpx):
    # grid = (N, num_px_tiles); p (pixel-tile index) is the inner "arbitrary" axis.
    p = pl.program_id(1)

    @pl.when(p == 0)
    def _():
        acc_ref[...] = jnp.zeros_like(acc_ref)

    x = pred_ref[0].astype(jnp.float32)            # (C, TPX): classes on sublanes,
                                                   #           pixels on lanes
    # log_softmax denominator over the class axis (tiny sublane reduction).
    m = jnp.max(x, axis=0, keepdims=True)          # (1, TPX)
    lse = m + jnp.log(jnp.sum(jnp.exp(x - m), axis=0, keepdims=True))  # (1, TPX)

    # torch.gather(logp, 1, target): one-hot select of the target class per pixel.
    # logp[t] = x[t] - lse, so gather on x and subtract lse once.
    tgt = tgt_ref[0]                               # (1, TPX) int32
    cls = jax.lax.broadcasted_iota(jnp.int32, x.shape, 0)
    x_t = jnp.sum(jnp.where(cls == tgt, x, 0.0), axis=0, keepdims=True)  # (1, TPX)
    gathered = x_t - lse                           # (1, TPX)

    if hw % tpx != 0:
        # Mask over-read / padded pixels in the last tile.  Must stay a select
        # (not a multiply) so garbage/NaN in the tail cannot leak into the sum.
        px = p * tpx + jax.lax.broadcasted_iota(jnp.int32, (1, tpx), 1)
        gathered = jnp.where(px < hw, gathered, 0.0)

    acc_ref[...] += gathered

    @pl.when(p == pl.num_programs(1) - 1)
    def _():
        s = jnp.sum(acc_ref[...])                  # one cross-lane reduce per image
        out_ref[...] = jnp.broadcast_to(s, out_ref.shape)


def weighted_cross_entropy_loss(pred, target, weights=None, *, tile_px=32768):
    """pred: (N, C, H, W) float; target: (N, H, W) int; weights: (2,) int.

    Returns the scalar f32 loss matching the PyTorch module's forward pass.
    """
    if weights is None:
        weights = jnp.array([1, 15], dtype=jnp.int32)

    n, c, h, w = pred.shape
    hw = h * w
    total = n * hw

    # Natural NCHW layout: (N, C, H*W) is a free row-major view (no transpose,
    # no dtype cast -> kernel DMAs the input in its native precision).
    pred3 = pred.reshape(n, c, hw)
    tgt3 = target.reshape(n, 1, hw).astype(jnp.int32)

    # Lane-align the pixel axis.  No copy in the common case (H*W % 128 == 0);
    # any padded pixels are masked out inside the kernel.
    hw_pad = pl.cdiv(hw, 128) * 128
    if hw_pad != hw:
        pred3 = jnp.pad(pred3, ((0, 0), (0, 0), (0, hw_pad - hw)))
        tgt3 = jnp.pad(tgt3, ((0, 0), (0, 0), (0, hw_pad - hw)))

    # Pixel-tile size: big (amortizes per-step overhead) but capped so a
    # double-buffered pred block stays comfortably inside scoped VMEM on v5e.
    itemsize = jnp.dtype(pred.dtype).itemsize
    max_block_bytes = 4 * 1024 * 1024
    tpx_cap = max(128, (max_block_bytes // (c * itemsize)) // 128 * 128)
    tpx = min(tile_px, hw_pad, tpx_cap)
    tpx = max(128, (tpx // 128) * 128)
    n_px = pl.cdiv(hw_pad, tpx)

    kernel = functools.partial(_wce_sum_kernel, hw=hw, tpx=tpx)

    partial_sums = pl.pallas_call(
        kernel,
        out_shape=jax.ShapeDtypeStruct((n, 1, 128), jnp.float32),
        grid_spec=pltpu.PrefetchScalarGridSpec(
            num_scalar_prefetch=0,
            grid=(n, n_px),
            in_specs=[
                pl.BlockSpec((1, c, tpx), lambda i, p: (i, 0, p)),
                pl.BlockSpec((1, 1, tpx), lambda i, p: (i, 0, p)),
            ],
            out_specs=pl.BlockSpec((1, 1, 128), lambda i, p: (i, 0, 0)),
            scratch_shapes=[pltpu.VMEM((1, tpx), jnp.float32)],
        ),
        compiler_params=pltpu.CompilerParams(
            dimension_semantics=("parallel", "arbitrary")),
    )(pred3, tgt3)

    # Weighted term: per-pixel value is logp_g * sum(w) / sum(w).  The weights
    # cancel; keep the (sum/sum) factor so degenerate sum(w)==0 reproduces the
    # reference's divide-by-zero behavior.
    wsum = weights.astype(jnp.float32).sum()
    scale = wsum / wsum
    total_logp = jnp.sum(partial_sums[:, 0, 0])
    return -(total_logp * scale) / jnp.float32(total)


def _reference(pred, target, weights):
    # Pure-JAX reference mirroring the PyTorch math for validation.
    logp = jax.nn.log_softmax(pred.astype(jnp.float32), axis=1)        # (N, C, H, W)
    logp_g = jnp.take_along_axis(logp, target[:, None, :, :], axis=1)  # (N, 1, H, W)
    wf = weights.astype(jnp.float32)
    weighted_logp = logp_g * wf.reshape(1, -1, 1, 1)                   # (N, 2, H, W)
    weighted_loss = weighted_logp.sum(axis=1) / wf.sum()
    return -weighted_loss.mean()


if __name__ == "__main__":
    key = jax.random.PRNGKey(0)
    k1, k2 = jax.random.split(key)

    N, C, H, W = 2, 4, 16, 16
    pred = jax.random.normal(k1, (N, C, H, W), dtype=jnp.float32)
    target = jax.random.randint(k2, (N, H, W), 0, C, dtype=jnp.int32)
    weights = jnp.array([1, 15], dtype=jnp.int32)

    loss = jax.block_until_ready(weighted_cross_entropy_loss(pred, target, weights))
    ref = jax.block_until_ready(_reference(pred, target, weights))
    assert jnp.allclose(loss, ref, atol=1e-5, rtol=1e-5), (loss, ref)

    print("KERNEL_OK")
</pallas_src>

<mosaic_0001>
module attributes {stable_mosaic.version = 11 : i64} {
  func.func @_wce_sum_kernel(%arg0: i32, %arg1: i32, %arg2: memref<1x4x256xf32, #tpu.memory_space<vmem>>, %arg3: memref<1x1x256xi32, #tpu.memory_space<vmem>>, %arg4: memref<1x1x128xf32, #tpu.memory_space<vmem>>, %arg5: memref<1x256xf32, #tpu.memory_space<vmem>>) attributes {dimension_semantics = [#tpu.dimension_semantics<parallel>, #tpu.dimension_semantics<arbitrary>], iteration_bounds = array<i64: 2, 1>, scalar_prefetch = 0 : i64, scratch_operands = 1 : i64, tpu.core_type = #tpu.core_type<tc>, window_params = [{transform_indices = @transform_0, window_bounds = array<i64: 1, 4, 256>}, {transform_indices = @transform_1, window_bounds = array<i64: 1, 1, 256>}, {transform_indices = @transform_2, window_bounds = array<i64: 1, 1, 128>}]} {
    %c0_i32 = arith.constant 0 : i32
    %0 = arith.cmpi eq, %arg1, %c0_i32 : i32
    %1 = arith.extui %0 : i1 to i32
    %c0_i32_0 = arith.constant 0 : i32
    %2 = arith.cmpi ne, %1, %c0_i32_0 : i32
    scf.if %2 {
      %cst_15 = arith.constant 0.000000e+00 : f32
      %30 = vector.broadcast %cst_15 : f32 to vector<1x256xf32>
      %c0_16 = arith.constant 0 : index
      %c0_17 = arith.constant 0 : index
      %31 = vector.load %arg5[%c0_16, %c0_17] : memref<1x256xf32, #tpu.memory_space<vmem>>, vector<1x256xf32>
      tpu.vector_store %arg5[%c0_16, %c0_17], %30 {strides = array<i32>} : memref<1x256xf32, #tpu.memory_space<vmem>>, vector<1x256xf32>,
    } else {
    }
    %c0 = arith.constant 0 : index
    %c0_1 = arith.constant 0 : index
    %c0_2 = arith.constant 0 : index
    %3 = vector.load %arg2[%c0, %c0_1, %c0_2] : memref<1x4x256xf32, #tpu.memory_space<vmem>>, vector<1x4x256xf32>
    %4 = vector.shape_cast %3 : vector<1x4x256xf32> to vector<4x256xf32>
    %cst = arith.constant dense<0xFF800000> : vector<256xf32>
    %5 = vector.multi_reduction <maximumf>, %4, %cst [0] : vector<4x256xf32> to vector<256xf32>
    %6 = vector.shape_cast %5 : vector<256xf32> to vector<1x256xf32>
    %7 = vector.broadcast %6 : vector<1x256xf32> to vector<4x256xf32>
    %8 = arith.subf %4, %7 : vector<4x256xf32>
    %9 = math.exp %8 : vector<4x256xf32>
    %cst_3 = arith.constant dense<0.000000e+00> : vector<256xf32>
    %10 = vector.multi_reduction <add>, %9, %cst_3 [0] : vector<4x256xf32> to vector<256xf32>
    %11 = vector.shape_cast %10 : vector<256xf32> to vector<1x256xf32>
    %12 = math.log %11 : vector<1x256xf32>
    %13 = arith.addf %6, %12 : vector<1x256xf32>
    %c0_4 = arith.constant 0 : index
    %c0_5 = arith.constant 0 : index
    %c0_6 = arith.constant 0 : index
    %14 = vector.load %arg3[%c0_4, %c0_5, %c0_6] : memref<1x1x256xi32, #tpu.memory_space<vmem>>, vector<1x1x256xi32>
    %15 = vector.shape_cast %14 : vector<1x1x256xi32> to vector<1x256xi32>
    %16 = tpu.iota {dimensions = array<i32: 0>} : vector<4x256xi32>
    %17 = vector.broadcast %15 : vector<1x256xi32> to vector<4x256xi32>
    %18 = arith.cmpi eq, %16, %17 : vector<4x256xi32>
    %cst_7 = arith.constant 0.000000e+00 : f32
    %19 = vector.broadcast %cst_7 : f32 to vector<4x256xf32>
    %20 = arith.select %18, %4, %19 : vector<4x256xi1>, vector<4x256xf32>
    %cst_8 = arith.constant dense<0.000000e+00> : vector<256xf32>
    %21 = vector.multi_reduction <add>, %20, %cst_8 [0] : vector<4x256xf32> to vector<256xf32>
    %22 = vector.shape_cast %21 : vector<256xf32> to vector<1x256xf32>
    %23 = arith.subf %22, %13 : vector<1x256xf32>
    %c0_9 = arith.constant 0 : index
    %c0_10 = arith.constant 0 : index
    %24 = vector.load %arg5[%c0_9, %c0_10] : memref<1x256xf32, #tpu.memory_space<vmem>>, vector<1x256xf32>
    %25 = arith.addf %24, %23 : vector<1x256xf32>
    %c0_11 = arith.constant 0 : index
    %c0_12 = arith.constant 0 : index
    %26 = vector.load %arg5[%c0_11, %c0_12] : memref<1x256xf32, #tpu.memory_space<vmem>>, vector<1x256xf32>
    tpu.vector_store %arg5[%c0_11, %c0_12], %25 {strides = array<i32>} : memref<1x256xf32, #tpu.memory_space<vmem>>, vector<1x256xf32>,
    %c0_i32_13 = arith.constant 0 : i32
    %27 = arith.cmpi eq, %arg1, %c0_i32_13 : i32
    %28 = arith.extui %27 : i1 to i32
    %c0_i32_14 = arith.constant 0 : i32
    %29 = arith.cmpi ne, %28, %c0_i32_14 : i32
    scf.if %29 {
      %c0_15 = arith.constant 0 : index
      %c0_16 = arith.constant 0 : index
      %30 = vector.load %arg5[%c0_15, %c0_16] : memref<1x256xf32, #tpu.memory_space<vmem>>, vector<1x256xf32>
      %31 = vector.shape_cast %30 : vector<1x256xf32> to vector<1x1x256xf32>
      %cst_17 = arith.constant dense<0.000000e+00> : vector<1xf32>
      %32 = vector.multi_reduction <add>, %31, %cst_17 [1, 2] : vector<1x1x256xf32> to vector<1xf32>
      %33 = vector.shape_cast %32 : vector<1xf32> to vector<1x1x1xf32>
      %34 = vector.extract %33[0, 0, 0] : f32 from vector<1x1x1xf32>
      %35 = vector.broadcast %34 : f32 to vector<1x1x128xf32>
      %c0_18 = arith.constant 0 : index
      %c0_19 = arith.constant 0 : index
      %c0_20 = arith.constant 0 : index
      %36 = vector.load %arg4[%c0_18, %c0_19, %c0_20] : memref<1x1x128xf32, #tpu.memory_space<vmem>>, vector<1x1x128xf32>
      tpu.vector_store %arg4[%c0_18, %c0_19, %c0_20], %35 {strides = array<i32>} : memref<1x1x128xf32, #tpu.memory_space<vmem>>, vector<1x1x128xf32>,
    } else {
    }
    return
  }
  func.func @transform_0(%arg0: i32, %arg1: i32) -> (i32, i32, i32) {
    %c0_i32 = arith.constant 0 : i32
    %c0_i32_0 = arith.constant 0 : i32
    return %arg0, %c0_i32, %arg1 : i32, i32, i32
  }
  func.func @transform_1(%arg0: i32, %arg1: i32) -> (i32, i32, i32) {
    %c0_i32 = arith.constant 0 : i32
    %c0_i32_0 = arith.constant 0 : i32
    return %arg0, %c0_i32, %arg1 : i32, i32, i32
  }
  func.func @transform_2(%arg0: i32, %arg1: i32) -> (i32, i32, i32) {
    %c0_i32 = arith.constant 0 : i32
    %c0_i32_0 = arith.constant 0 : i32
    %c0_i32_1 = arith.constant 0 : i32
    return %arg0, %c0_i32, %c0_i32_0 : i32, i32, i32
  }
}

</mosaic_0001>

<llo_original>
// kernel: tpu_custom_call.1
$region0: #{tpu_custom_call.1}
  #allocation0 [shape = 'u32[]', space=smem, size = 0x4, offset = 0x4, fixed_abs, tag = 'smem constant byte address 0x4 - core index']
  #allocation1 [shape = 'u32[144,128]{1,0:T(1,128)}', space=vmem, size = 0x12000, scoped, tag = 'internal scratch']
  #allocation2 [shape = 'f32[1,256]{1,0:T(1,128)}', space=vmem, size = 0x400, scoped, tag = 'scratch operand']
  %s0 = inlined_call_operand.hbm [shape: f32[2,4,256], index: 0, kind: input, shape index: {}]
  %s1 = inlined_call_operand.hbm [shape: s32[2,1,256], index: 1, kind: input, shape index: {}]
  %s2 = inlined_call_operand.hbm [shape: f32[2,1,128], index: 2, kind: output, shape index: {}]
  %s3 = sld [smem:[#allocation0]]
  $region57: #{tpu_custom_call.1} parent=0
    _
  %s5 = ssub.s32 1, %s3
  %s6 = scalar_select 0, %s5, %s3
  $region1: #{tpu_custom_call.1} parent=0
    #allocation3 [shape = 'u8[8192]{0}', space=vmem, size = 0x2000, scoped, tag = 'input window, operand 0']
    #allocation4 [shape = 's32[2]{0}', space=sflag, size = 0x8, scoped, tag = 'scoped memory for tpu_custom_call.1']
    #allocation5 [shape = 's32[2]{0}', space=sflag, size = 0x8, scoped, tag = 'scoped memory for tpu_custom_call.1']
    #allocation6 [shape = 'u8[2048]{0}', space=vmem, size = 0x800, scoped, tag = 'input window, operand 1']
    #allocation7 [shape = 's32[2]{0}', space=sflag, size = 0x8, scoped, tag = 'scoped memory for tpu_custom_call.1']
    #allocation8 [shape = 'u8[1024]{0}', space=vmem, size = 0x400, scoped, tag = 'output window, operand 0']
    %7 = vsyncpa [#allocation4], 0
    %s8 = scalar_lea.sflag [#allocation4], 1
    %9 = vsyncpa %s8, 0
    %10 = vsyncpa [#allocation7], 0
    %s11 = scalar_lea.sflag [#allocation7], 1
    %12 = vsyncpa %s11, 0
    %13 = vsyncpa [#allocation5], 0
    %s14 = scalar_lea.sflag [#allocation5], 1
    %15 = vsyncpa %s14, 0
    loop: start=0, step=1, limit=4
    $region2: #{tpu_custom_call.1} parent=1 // loop_pre_header
      _
    $region3: #{tpu_custom_call.1} parent=1 // loop_header
      %s17 = sphi 0, %s21
      %p18 = scmp.ge.s32.totalorder %s17, 4
      %s24 = sphi 0, %s36
      %s25 = sphi 0, %s32
      %s26 = sphi 0, %s24
      %s27 = sphi 0, %s25
      %s28 = sphi 0, %s26
      %s29 = sphi 0, %s27
      %s41 = sphi 0, %s43
      %s44 = sphi 0, %s41
      %s45 = sphi 0, %s44
      %s61 = sphi 0, %s45
      %s69 = sphi 0, %s71
      %s72 = sphi 0, %s69
      %s73 = sphi 0, %s72
      %s89 = sphi 0, %s73
      %s95 = sphi 0, %s97
      %s98 = sphi 0, %s95
      %s99 = sphi 0, %s98
      %s115 = sphi 0, %s99
    $region4: #{tpu_custom_call.1} parent=1 // loop_header_branch
      %20 = sbr.rel (%p18) target = $region8
    $region5: #{tpu_custom_call.1} parent=1 // loop_body
      %s22 = ssub.s32 %s17, 1
      %s23 = ssub.s32 %s17, 2
      %s30 = sadd.s32 1, %s25
      %p31 = scmp.ge.s32.totalorder %s30, 1
      %s32 = scalar_select %p31, 0, %s30
      %s33 = sadd.s32 1, %s24
      %s34 = scalar_select %p31, %s33, %s24
      %p35 = scmp.ge.s32.totalorder %s34, 2
      %s36 = scalar_select %p35, 0, %s34
      %s37 = ssub.s32 %s24, %s36
      %s38 = ssub.s32 %s25, %s32
      %s39 = sor.u32 %s37, %s38
      %p40 = scmp.eq.s32.totalorder %s39, 0
      %s42 = sadd.s32 %s41, 1
      %s43 = scalar_select %p40, %s41, %s42
      %p46 = pneg %p40
      %p47 = scmp.eq.s32.totalorder %s17, 1
      %p48 = por %p46, %p47
      %p49 = scmp.ne.s32.totalorder %s41, %s44
      %p50 = scmp.eq.s32.totalorder %s17, 0
      %p51 = por %p49, %p50
      %p52 = scmp.ne.s32.totalorder %s41, %s44
      %p53 = scmp.eq.s32.totalorder %s22, 1
      %p54 = por %p52, %p53
      %p55 = scmp.ne.s32.totalorder %s44, %s45
      %p56 = scmp.eq.s32.totalorder %s22, 0
      %p57 = por %p55, %p56
      %p58 = scmp.ne.s32.totalorder %s44, %s45
      %p59 = scmp.eq.s32.totalorder %s23, 1
      %p60 = por %p58, %p59
      %p62 = scmp.ne.s32.totalorder %s45, %s61
      %p63 = scmp.eq.s32.totalorder %s23, 0
      %p64 = por %p62, %p63
      %s65 = ssub.s32 %s24, %s36
      %s66 = ssub.s32 %s25, %s32
      %s67 = sor.u32 %s65, %s66
      %p68 = scmp.eq.s32.totalorder %s67, 0
      %s70 = sadd.s32 %s69, 1
      %s71 = scalar_select %p68, %s69, %s70
      %p74 = pneg %p68
      %p75 = scmp.eq.s32.totalorder %s17, 1
      %p76 = por %p74, %p75
      %p77 = scmp.ne.s32.totalorder %s69, %s72
      %p78 = scmp.eq.s32.totalorder %s17, 0
      %p79 = por %p77, %p78
      %p80 = scmp.ne.s32.totalorder %s69, %s72
      %p81 = scmp.eq.s32.totalorder %s22, 1
      %p82 = por %p80, %p81
      %p83 = scmp.ne.s32.totalorder %s72, %s73
      %p84 = scmp.eq.s32.totalorder %s22, 0
      %p85 = por %p83, %p84
      %p86 = scmp.ne.s32.totalorder %s72, %s73
      %p87 = scmp.eq.s32.totalorder %s23, 1
      %p88 = por %p86, %p87
      %p90 = scmp.ne.s32.totalorder %s73, %s89
      %p91 = scmp.eq.s32.totalorder %s23, 0
      %p92 = por %p90, %p91
      %s93 = ssub.s32 %s24, %s36
      %p94 = scmp.eq.s32.totalorder %s93, 0
      %s96 = sadd.s32 %s95, 1
      %s97 = scalar_select %p94, %s95, %s96
      %p100 = pneg %p94
      %p101 = scmp.eq.s32.totalorder %s17, 1
      %p102 = por %p100, %p101
      %p103 = scmp.ne.s32.totalorder %s95, %s98
      %p104 = scmp.eq.s32.totalorder %s17, 0
      %p105 = por %p103, %p104
      %p106 = scmp.ne.s32.totalorder %s95, %s98
      %p107 = scmp.eq.s32.totalorder %s22, 1
      %p108 = por %p106, %p107
      %p109 = scmp.ne.s32.totalorder %s98, %s99
      %p110 = scmp.eq.s32.totalorder %s22, 0
      %p111 = por %p109, %p110
      %p112 = scmp.ne.s32.totalorder %s98, %s99
      %p113 = scmp.eq.s32.totalorder %s23, 1
      %p114 = por %p112, %p113
      %p116 = scmp.ne.s32.totalorder %s99, %s115
      %p117 = scmp.eq.s32.totalorder %s23, 0
      %p118 = por %p116, %p117
      %p119 = scmp.le.s32.totalorder 1, %s17
      %p120 = scmp.lt.s32.totalorder %s17, 3
      %p121 = pnand %p119, %p120
      %p122 = pneg %p121
      // Predicated region
      $region9: #{tpu_custom_call.1} parent=5 // pred_check
        _
      $region10: #{tpu_custom_call.1} parent=5 // pred_check_branch
        %124 = sbr.rel (%p121) target = $region12
      $region11: #{tpu_custom_call.1} parent=5 // pred_region
        %s125 = ssub.s32 %s17, 1
      $region12: #{tpu_custom_call.1} parent=5 // pred_fallthru
        _
      %p126 = scmp.lt.s32.totalorder %s17, 2
      // Predicated region
      $region13: #{tpu_custom_call.1} parent=5 // pred_check
        %p127 = pneg %p126
      $region14: #{tpu_custom_call.1} parent=5 // pred_check_branch
        %129 = sbr.rel (%p127) target = $region16
      $region15: #{tpu_custom_call.1} parent=5 // pred_region
        // Predicated region
        $region17: #{tpu_custom_call.1} parent=15 // pred_check
          %p130 = pneg %p51
        $region18: #{tpu_custom_call.1} parent=15 // pred_check_branch
          %132 = sbr.rel (%p130) target = $region20
        $region19: #{tpu_custom_call.1} parent=15 // pred_region
          %s133 = sand.u32 %s41, 1
          %s134 = scalar_lea.sflag [#allocation4], %s133
          %s135 = sand.u32 %s41, 1
          %s136 = smul.addr %s135, 8
          %s137 = scalar_lea.vmem [#allocation3], %s136
          %s138 = smul.u32 2, %s25
          %s140 = ssub.s32 128, 128
          %141 = vsyncadd %s134, %s140
          %s142 = smul.addr %s24, 2
          %s143 = sadd.s32 %s138, %s142
          %s144 = smul.addr %s143, 64
          %s145 = scalar_lea.hbm %s0, %s144
          %s147 = sshll.u32 %s137, 4
          %s148 = int_to_ptr.vmem [resolvable:$true] %s147
          %150 = dma.hbm_to_vmem [thread:$0]  %s145, 128, %s148, %s134
        $region20: #{tpu_custom_call.1} parent=15 // pred_fallthru
          _
        // Predicated region
        $region21: #{tpu_custom_call.1} parent=15 // pred_check
          %p151 = pneg %p79
        $region22: #{tpu_custom_call.1} parent=15 // pred_check_branch
          %153 = sbr.rel (%p151) target = $region24
        $region23: #{tpu_custom_call.1} parent=15 // pred_region
          %s154 = sand.u32 %s69, 1
          %s155 = scalar_lea.sflag [#allocation7], %s154
          %s156 = sand.u32 %s69, 1
          %s157 = smul.addr %s156, 2
          %s158 = scalar_lea.vmem [#allocation6], %s157
          %s159 = smul.u32 2, %s25
          %s161 = ssub.s32 32, 32
          %162 = vsyncadd %s155, %s161
          %s163 = smul.addr %s24, 2
          %s164 = sadd.s32 %s159, %s163
          %s165 = smul.addr %s164, 16
          %s166 = scalar_lea.hbm %s1, %s165
          %s168 = sshll.u32 %s158, 4
          %s169 = int_to_ptr.vmem [resolvable:$true] %s168
          %171 = dma.hbm_to_vmem [thread:$0]  %s166, 32, %s169, %s155
        $region24: #{tpu_custom_call.1} parent=15 // pred_fallthru
          _
      $region16: #{tpu_custom_call.1} parent=5 // pred_fallthru
        _
      %p172 = scmp.le.s32.totalorder 1, %s17
      %p173 = scmp.lt.s32.totalorder %s17, 3
      %p174 = pnand %p172, %p173
      %p175 = pneg %p174
      // Predicated region
      $region25: #{tpu_custom_call.1} parent=5 // pred_check
        _
      $region26: #{tpu_custom_call.1} parent=5 // pred_check_branch
        %177 = sbr.rel (%p174) target = $region28
      $region27: #{tpu_custom_call.1} parent=5 // pred_region
        %s178 = ssub.s32 %s17, 1
        %s179 = sand.u32 %s44, 1
        %s180 = scalar_lea.sflag [#allocation4], %s179
        %s181 = sand.u32 %s44, 1
        %s182 = smul.addr %s181, 8
        %s183 = scalar_lea.vmem [#allocation3], %s182
        // Predicated region
        $region29: #{tpu_custom_call.1} parent=27 // pred_check
          %p184 = pneg %p57
        $region30: #{tpu_custom_call.1} parent=27 // pred_check_branch
          %186 = sbr.rel (%p184) target = $region32
        $region31: #{tpu_custom_call.1} parent=27 // pred_region
          %187 = dma.done %s180, 128
        $region32: #{tpu_custom_call.1} parent=27 // pred_fallthru
          _
        %s188 = sand.u32 %s72, 1
        %s189 = scalar_lea.sflag [#allocation7], %s188
        %s190 = sand.u32 %s72, 1
        %s191 = smul.addr %s190, 2
        %s192 = scalar_lea.vmem [#allocation6], %s191
        // Predicated region
        $region33: #{tpu_custom_call.1} parent=27 // pred_check
          %p193 = pneg %p85
        $region34: #{tpu_custom_call.1} parent=27 // pred_check_branch
          %195 = sbr.rel (%p193) target = $region36
        $region35: #{tpu_custom_call.1} parent=27 // pred_region
          %196 = dma.done %s189, 32
        $region36: #{tpu_custom_call.1} parent=27 // pred_fallthru
          _
        %s197 = sand.u32 %s44, 1
        %s198 = scalar_lea.sflag [#allocation4], %s197
        %s199 = sand.u32 %s44, 1
        %s200 = smul.addr %s199, 8
        %s201 = scalar_lea.vmem [#allocation3], %s200
        %p202 = pneg %p57
        %p203 = pneg %p54
        %s204 = sand.u32 %s72, 1
        %s205 = scalar_lea.sflag [#allocation7], %s204
        %s206 = sand.u32 %s72, 1
        %s207 = smul.addr %s206, 2
        %s208 = scalar_lea.vmem [#allocation6], %s207
        %p209 = pneg %p85
        %p210 = pneg %p82
        %p211 = pneg %p111
        %p212 = pneg %p108
        %s213 = sand.u32 %s98, 1
        %s214 = scalar_lea.sflag [#allocation5], %s213
        %s215 = sand.u32 %s98, 1
        %s216 = scalar_lea.vmem [#allocation8], %s215
        %s217 = smul.u32 2, %s27
        %s218 = smul.u32 2, %s27
        %p219 = scmp.eq.s32.totalorder %s27, 0
        // Predicated region
        $region37: #{tpu_custom_call.1} parent=27 // pred_check
          %p220 = pneg %p219
        $region38: #{tpu_custom_call.1} parent=27 // pred_check_branch
          %222 = sbr.rel (%p220) target = $region40
        $region39: #{tpu_custom_call.1} parent=27 // pred_region
          %v223 = vlaneseq
          %vm224 = vcmp.ge.s32.totalorder %v223, 0
          %vm225 = vcmp.lt.s32.totalorder %v223, 256
          %vm226 = vmand %vm224, %vm225
          %227 = vst.msk [vmem:[#allocation2] sm:$0x3] %vm226, 0.0
        $region40: #{tpu_custom_call.1} parent=27 // pred_fallthru
          _
        %v228 = vld [vmem:[%s183] sm:$0xff]
        %v230 = vcombine.high %v228, %v228
        %vm232 = vcmask 1043456
        %v233 = vsel %vm232, %v228, -inf
        %v234 = vrot.slane %v233, 4
        %v235 = vmax.f32 %v233, %v234
        %v236 = vrot.slane %v235, 2
        %v237 = vmax.f32 %v235, %v236
        %v238 = vrot.slane %v237, 1
        %v239 = vmax.f32 %v237, %v238
        %v240 = vsel %vm232, %v230, -inf
        %v241 = vrot.slane %v240, 4
        %v242 = vmax.f32 %v240, %v241
        %v243 = vrot.slane %v242, 2
        %v244 = vmax.f32 %v242, %v243
        %v245 = vrot.slane %v244, 1
        %v246 = vmax.f32 %v244, %v245
        %v249 = vcombine.low %v239, %v246
        %v251 = vsub.f32 %v228, %v249
        %v252 = vmul.f32 %v251, 1.442695
        %v253 = vpow.pop %v252
        %v255 = vcombine.high %v253, %v253
        %v257 = vsel %vm232, %v253, 0.0
        %v258 = vrot.slane %v257, 4
        %v259 = vadd.f32 %v257, %v258
        %v260 = vrot.slane %v259, 2
        %v261 = vadd.f32 %v259, %v260
        %v262 = vrot.slane %v261, 1
        %v263 = vadd.f32 %v261, %v262
        %v264 = vsel %vm232, %v255, 0.0
        %v265 = vrot.slane %v264, 4
        %v266 = vadd.f32 %v264, %v265
        %v267 = vrot.slane %v266, 2
        %v268 = vadd.f32 %v266, %v267
        %v269 = vrot.slane %v268, 1
        %v270 = vadd.f32 %v268, %v269
        %v271 = vlog2.pop %v263
        %v272 = vmul.f32 %v271, 0.6931472
        %v273 = vlog2.pop %v270
        %v274 = vmul.f32 %v273, 0.6931472
        %v275 = vadd.f32 %v239, %v272
        %v276 = vadd.f32 %v246, %v274
        %v277 = vld [vmem:[%s192] sm:$0x3]
        %v278 = vlaneseq
        %v279 = vshrl.u32 %v278, 7
        %v280 = vlaneseq
        %v281 = vshrl.u32 %v280, 7
        %v282 = vsub.s32 0, %v281
        %v283 = vrot.slane %v277, %v282
        %v284 = vlaneseq
        %v285 = vshrl.u32 %v284, 7
        %v286 = vsub.s32 1, %v285
        %v287 = vrot.slane %v277, %v286
        %vm288 = vcmp.eq.s32.totalorder %v279, %v283
        %vm289 = vcmp.eq.s32.totalorder %v279, %v287
        %v290 = vsel %vm288, %v228, 0.0
        %v291 = vsel %vm289, %v230, 0.0
        %v292 = vsel %vm232, %v290, 0.0
        %v293 = vrot.slane %v292, 4
        %v294 = vadd.f32 %v292, %v293
        %v295 = vrot.slane %v294, 2
        %v296 = vadd.f32 %v294, %v295
        %v297 = vrot.slane %v296, 1
        %v298 = vadd.f32 %v296, %v297
        %v299 = vsel %vm232, %v291, 0.0
        %v300 = vrot.slane %v299, 4
        %v301 = vadd.f32 %v299, %v300
        %v302 = vrot.slane %v301, 2
        %v303 = vadd.f32 %v301, %v302
        %v304 = vrot.slane %v303, 1
        %v305 = vadd.f32 %v303, %v304
        %v306 = vsub.f32 %v298, %v275
        %v307 = vsub.f32 %v305, %v276
        %v308 = vld [vmem:[#allocation2] sm:$0x3]
        %v311 = vcombine.low %v306, %v307
        %v313 = vunpack.c.l.s4 1966171168
        %v314 = vunpack.c.0.s8 %v313
        %v315 = vlaneseq
        %v316 = vshrl.u32 %v315, 7
        %v317 = vsub.s32 %v314, %v316
        %v318 = vrot.slane %v311, %v317
        %v320 = vunpack.c.l.s4 1966171168
        %v321 = vunpack.c.0.s8 %v320
        %v322 = vlaneseq
        %v323 = vshrl.u32 %v322, 7
        %v324 = vsub.s32 %v321, %v323
        %v325 = vrot.slane %v318, %v324
        %v327 = vadd.f32 %v308, %v325
        %v328 = vlaneseq
        %vm329 = vcmp.ge.s32.totalorder %v328, 0
        %vm330 = vcmp.lt.s32.totalorder %v328, 256
        %vm331 = vmand %vm329, %vm330
        %332 = vst.msk [vmem:[#allocation2] sm:$0x3] %vm331, %v327
        // Predicated region
        $region41: #{tpu_custom_call.1} parent=27 // pred_check
          %p333 = pneg %p219
        $region42: #{tpu_custom_call.1} parent=27 // pred_check_branch
          %335 = sbr.rel (%p333) target = $region44
        $region43: #{tpu_custom_call.1} parent=27 // pred_region
          %v336 = vld [vmem:[#allocation2] sm:$0x3]
          %v338 = vlaneseq
          %v339 = vshrl.u32 %v338, 7
          %v340 = vsub.s32 0, %v339
          %v341 = vrot.slane %v336, %v340
          %v342 = vlaneseq
          %v343 = vshrl.u32 %v342, 7
          %v344 = vsub.s32 1, %v343
          %v345 = vrot.slane %v336, %v344
          %vm348 = vcmask 1040384
          %v349 = vsel %vm348, %v341, 0.0
          %v350 = vsel %vm348, %v345, 0.0
          %v351 = vadd.f32 %v349, %v350
          %352 = vadd.xlane.f32.xlu0 %v351
          %v353 = vpop.xlane.xlu0 %352
          %v354 = vrot.slane %v353, 4
          %v355 = vadd.f32 %v353, %v354
          %v356 = vrot.slane %v355, 2
          %v357 = vadd.f32 %v355, %v356
          %v358 = vrot.slane %v357, 1
          %v359 = vadd.f32 %v357, %v358
          %s360 = vtos %v359
          %v361 = vstv %s360
          %362 = vst [vmem:[%s216] sm:$0x1] %v361
        $region44: #{tpu_custom_call.1} parent=27 // pred_fallthru
          _
        %s363 = sand.u32 %s98, 1
        %s364 = scalar_lea.sflag [#allocation5], %s363
        %s365 = sand.u32 %s98, 1
        %s366 = scalar_lea.vmem [#allocation8], %s365
        // Predicated region
        $region45: #{tpu_custom_call.1} parent=27 // pred_check
          %p367 = pneg %p108
        $region46: #{tpu_custom_call.1} parent=27 // pred_check_branch
          %369 = sbr.rel (%p367) target = $region48
        $region47: #{tpu_custom_call.1} parent=27 // pred_region
          %s371 = ssub.s32 16, 16
          %372 = vsyncadd %s364, %s371
          %s373 = smul.addr %s26, 16
          %s374 = scalar_lea.hbm %s2, %s373
          %s376 = sshll.u32 %s366, 4
          %s377 = int_to_ptr.vmem [resolvable:$true] %s376
          %379 = dma.vmem_to_hbm [thread:$0]  %s377, 16, %s374, %s364
        $region48: #{tpu_custom_call.1} parent=27 // pred_fallthru
          _
      $region28: #{tpu_custom_call.1} parent=5 // pred_fallthru
        _
      %p380 = scmp.le.s32.totalorder 2, %s17
      // Predicated region
      $region49: #{tpu_custom_call.1} parent=5 // pred_check
        %p381 = pneg %p380
      $region50: #{tpu_custom_call.1} parent=5 // pred_check_branch
        %383 = sbr.rel (%p381) target = $region52
      $region51: #{tpu_custom_call.1} parent=5 // pred_region
        %s384 = ssub.s32 %s17, 2
        // Predicated region
        $region53: #{tpu_custom_call.1} parent=51 // pred_check
          %p385 = pneg %p114
        $region54: #{tpu_custom_call.1} parent=51 // pred_check_branch
          %387 = sbr.rel (%p385) target = $region56
        $region55: #{tpu_custom_call.1} parent=51 // pred_region
          %s388 = sand.u32 %s99, 1
          %s389 = scalar_lea.sflag [#allocation5], %s388
          %s390 = sand.u32 %s99, 1
          %s391 = scalar_lea.vmem [#allocation8], %s390
          %392 = dma.done %s389, 16
        $region56: #{tpu_custom_call.1} parent=51 // pred_fallthru
          _
      $region52: #{tpu_custom_call.1} parent=5 // pred_fallthru
        _
    $region6: #{tpu_custom_call.1} parent=1 // loop_footer
      %s21 = sadd.s32 1, %s17
    $region7: #{tpu_custom_call.1} parent=1 // loop_footer_branch
      %16 = sbr.rel target = $region3
    $region8: #{tpu_custom_call.1} parent=1 // loop_exit
      _
    %393 = vsyncpa [#allocation4], 1
    %s394 = scalar_lea.sflag [#allocation4], 1
    %395 = vsyncpa %s394, 1
    %396 = vsyncpa [#allocation7], 1
    %s397 = scalar_lea.sflag [#allocation7], 1
    %398 = vsyncpa %s397, 1
    %399 = vsyncpa [#allocation5], 1
    %s400 = scalar_lea.sflag [#allocation5], 1
    %401 = vsyncpa %s400, 1

</llo_original>
